<compile_context>
chip_gen: v7x
topology: tpu7x:2x2x1
jax: 0.10.0
libtpu: 0.0.40
codegen_flags: <defaults>
</compile_context>

<pallas_src>
import functools

import jax
import jax.numpy as jnp
from jax.experimental import pallas as pl
from jax.experimental.pallas import tpu as pltpu


def _round_up(n, m):
    return ((n + m - 1) // m) * m


def _log_sigmoid(x):
    # numerically stable log(sigmoid(x)) = min(x, 0) - log1p(exp(-|x|))
    return jnp.minimum(x, 0.0) - jnp.log1p(jnp.exp(-jnp.abs(x)))


def ann_mlp_kernel(x_ref, w1_ref, w2_ref, w3_ref, b1_ref, b2_ref, b3_ref, o_ref):
    """One batch tile: three MXU dots (f32 accumulate), log-sigmoid on VPU/EUP."""
    x = x_ref[...]                                                     # (tile_b, X_dim)

    h1 = jnp.dot(x, w1_ref[...], preferred_element_type=jnp.float32)
    h1 = _log_sigmoid(h1 + b1_ref[...])                                # (tile_b, hidden) f32

    h2 = jnp.dot(h1.astype(w2_ref.dtype), w2_ref[...],
                 preferred_element_type=jnp.float32)
    h2 = _log_sigmoid(h2 + b2_ref[...])                                # (tile_b, X_dim) f32

    out = jnp.dot(h2.astype(w3_ref.dtype), w3_ref[...],
                  preferred_element_type=jnp.float32)
    o_ref[...] = (out + b3_ref[...]).astype(o_ref.dtype)               # (tile_b, y_dim)


@functools.partial(jax.jit, static_argnames=("tile_b", "use_bf16"))
def ann_forward(x, params, *, tile_b=4096, use_bf16=True):
    """x: (B, X_dim) float32; params: dict of w1,b1,w2,b2,w3,b3 (weights are (in, out))."""
    w1, b1 = params["w1"], params["b1"]
    w2, b2 = params["w2"], params["b2"]
    w3, b3 = params["w3"], params["b3"]

    B, x_dim = x.shape
    hidden = w1.shape[1]
    y_dim = w3.shape[1]

    # Batch tiling: large tiles amortize per-step overhead, but keep the grid at
    # >= 2 steps so the "parallel" axis can shard across v7x's two TensorCores.
    half_b = _round_up(max(pl.cdiv(B, 2), 1), 8)
    tile_b = max(8, min(_round_up(tile_b, 8), half_b))
    grid = (pl.cdiv(B, tile_b),)   # partial last block handled by clipped writeback

    # Optional bf16 matmul operands (f32 accumulation); bias/activations stay f32.
    op_dtype = jnp.bfloat16 if use_bf16 else jnp.float32
    x_in = x.astype(op_dtype)
    w1_in = w1.astype(op_dtype)
    w2_in = w2.astype(op_dtype)
    w3_in = w3.astype(op_dtype)
    b1_in = b1.astype(jnp.float32)
    b2_in = b2.astype(jnp.float32)
    b3_in = b3.astype(jnp.float32)

    out = pl.pallas_call(
        ann_mlp_kernel,
        out_shape=jax.ShapeDtypeStruct((B, y_dim), jnp.float32),
        grid_spec=pl.GridSpec(
            grid=grid,
            in_specs=[
                # Activations: tiled along batch, software-pipelined across steps.
                pl.BlockSpec((tile_b, x_dim), lambda i: (i, 0)),
                # Weights / biases: constant block index -> DMA'd once, VMEM resident.
                pl.BlockSpec((x_dim, hidden), lambda i: (0, 0)),
                pl.BlockSpec((hidden, x_dim), lambda i: (0, 0)),
                pl.BlockSpec((x_dim, y_dim), lambda i: (0, 0)),
                pl.BlockSpec((1, hidden), lambda i: (0, 0)),
                pl.BlockSpec((1, x_dim), lambda i: (0, 0)),
                pl.BlockSpec((1, y_dim), lambda i: (0, 0)),
            ],
            out_specs=pl.BlockSpec((tile_b, y_dim), lambda i: (i, 0)),
        ),
        compiler_params=pltpu.CompilerParams(
            # Parallel batch axis: shards across both TCs on v7x; no-op on v5e/v6e.
            dimension_semantics=("parallel",),
            # Conservative budget, safe on v7x (64 MiB physical); usage here is tiny.
            vmem_limit_bytes=32 * 1024 * 1024,
        ),
    )(x_in, w1_in, w2_in, w3_in, b1_in, b2_in, b3_in)

    return out


def init_params(key, x_dim, y_dim):
    """Deterministic init mimicking nn.Linear's uniform(-1/sqrt(fan_in), 1/sqrt(fan_in))."""
    hidden = x_dim * 2
    dims = [(x_dim, hidden), (hidden, x_dim), (x_dim, y_dim)]
    params = {}
    keys = jax.random.split(key, 2 * len(dims))
    for i, (fan_in, fan_out) in enumerate(dims):
        bound = 1.0 / jnp.sqrt(float(fan_in))
        w = jax.random.uniform(keys[2 * i], (fan_in, fan_out),
                               minval=-bound, maxval=bound, dtype=jnp.float32)
        b = jax.random.uniform(keys[2 * i + 1], (1, fan_out),
                               minval=-bound, maxval=bound, dtype=jnp.float32)
        params[f"w{i + 1}"] = w
        params[f"b{i + 1}"] = b
    return params


def reference_forward(x, p):
    h1 = _log_sigmoid(x @ p["w1"] + p["b1"])
    h2 = _log_sigmoid(h1 @ p["w2"] + p["b2"])
    return h2 @ p["w3"] + p["b3"]


if __name__ == "__main__":
    key = jax.random.PRNGKey(0)
    k_x, k_p, k_x2 = jax.random.split(key, 3)

    batch, x_dim, y_dim = 8, 16, 4          # hidden = 2 * x_dim = 32
    x = jax.random.normal(k_x, (batch, x_dim), dtype=jnp.float32)
    params = init_params(k_p, x_dim, y_dim)
    ref = reference_forward(x, params)

    # f32 path: bit-compatible with the PyTorch module semantics.
    out_f32 = jax.block_until_ready(ann_forward(x, params, use_bf16=False))
    assert out_f32.shape == (batch, y_dim)
    assert jnp.allclose(out_f32, ref, atol=1e-5, rtol=1e-5), "f32 mismatch vs reference"

    # Default path: bf16 matmul operands, f32 accumulate (looser tolerance).
    out_bf16 = jax.block_until_ready(ann_forward(x, params))
    assert jnp.allclose(out_bf16, ref, atol=5e-2, rtol=5e-2), "bf16 mismatch vs reference"

    # Multi-step grid + partial (unpadded) last tile: B=300, tile_b=128 -> grid=(3,).
    batch2 = 300
    x2 = jax.random.normal(k_x2, (batch2, x_dim), dtype=jnp.float32)
    out2 = jax.block_until_ready(ann_forward(x2, params, tile_b=128, use_bf16=False))
    ref2 = reference_forward(x2, params)
    assert out2.shape == (batch2, y_dim)
    assert jnp.allclose(out2, ref2, atol=1e-5, rtol=1e-5), "tiled mismatch vs reference"

    print("KERNEL_OK")
</pallas_src>

<mosaic_0001>
module attributes {stable_mosaic.version = 11 : i64} {
  func.func @ann_mlp_kernel(%arg0: i32, %arg1: memref<8x16xf32, #tpu.memory_space<vmem>>, %arg2: memref<16x32xf32, #tpu.memory_space<vmem>>, %arg3: memref<32x16xf32, #tpu.memory_space<vmem>>, %arg4: memref<16x4xf32, #tpu.memory_space<vmem>>, %arg5: memref<1x32xf32, #tpu.memory_space<vmem>>, %arg6: memref<1x16xf32, #tpu.memory_space<vmem>>, %arg7: memref<1x4xf32, #tpu.memory_space<vmem>>, %arg8: memref<8x4xf32, #tpu.memory_space<vmem>>) attributes {dimension_semantics = [#tpu.dimension_semantics<parallel>], iteration_bounds = array<i64: 1>, scalar_prefetch = 0 : i64, scratch_operands = 0 : i64, tpu.core_type = #tpu.core_type<tc>, window_params = [{transform_indices = @transform_0, window_bounds = array<i64: 8, 16>}, {pipeline_mode = #tpu.pipeline_mode<synchronous>, transform_indices = @transform_1, window_bounds = array<i64: 16, 32>}, {pipeline_mode = #tpu.pipeline_mode<synchronous>, transform_indices = @transform_2, window_bounds = array<i64: 32, 16>}, {pipeline_mode = #tpu.pipeline_mode<synchronous>, transform_indices = @transform_3, window_bounds = array<i64: 16, 4>}, {pipeline_mode = #tpu.pipeline_mode<synchronous>, transform_indices = @transform_4, window_bounds = array<i64: 1, 32>}, {pipeline_mode = #tpu.pipeline_mode<synchronous>, transform_indices = @transform_5, window_bounds = array<i64: 1, 16>}, {pipeline_mode = #tpu.pipeline_mode<synchronous>, transform_indices = @transform_6, window_bounds = array<i64: 1, 4>}, {transform_indices = @transform_7, window_bounds = array<i64: 8, 4>}]} {
    %c0 = arith.constant 0 : index
    %c0_0 = arith.constant 0 : index
    %0 = vector.load %arg1[%c0, %c0_0] : memref<8x16xf32, #tpu.memory_space<vmem>>, vector<8x16xf32>
    %c0_1 = arith.constant 0 : index
    %c0_2 = arith.constant 0 : index
    %1 = vector.load %arg2[%c0_1, %c0_2] : memref<16x32xf32, #tpu.memory_space<vmem>>, vector<16x32xf32>
    %cst = arith.constant dense<0.000000e+00> : vector<8x32xf32>
    %2 = tpu.matmul %0, %1, %cst {dimension_numbers = #tpu.dot_dimension_numbers<[1], [0], [0], [1], [0, 0, 1, 1], [], []>} : vector<8x16xf32>, vector<16x32xf32>, vector<8x32xf32> -> vector<8x32xf32>
    %c0_3 = arith.constant 0 : index
    %c0_4 = arith.constant 0 : index
    %3 = vector.load %arg5[%c0_3, %c0_4] : memref<1x32xf32, #tpu.memory_space<vmem>>, vector<1x32xf32>
    %4 = vector.broadcast %3 : vector<1x32xf32> to vector<8x32xf32>
    %5 = arith.addf %2, %4 : vector<8x32xf32>
    %cst_5 = arith.constant 0.000000e+00 : f32
    %6 = vector.broadcast %cst_5 : f32 to vector<8x32xf32>
    %7 = arith.minimumf %5, %6 : vector<8x32xf32>
    %8 = math.absf %5 : vector<8x32xf32>
    %cst_6 = arith.constant 0.000000e+00 : f32
    %9 = vector.broadcast %cst_6 : f32 to vector<8x32xf32>
    %10 = arith.subf %9, %8 : vector<8x32xf32>
    %11 = math.exp %10 : vector<8x32xf32>
    %12 = math.log1p %11 : vector<8x32xf32>
    %13 = arith.subf %7, %12 : vector<8x32xf32>
    %c0_7 = arith.constant 0 : index
    %c0_8 = arith.constant 0 : index
    %14 = vector.load %arg3[%c0_7, %c0_8] : memref<32x16xf32, #tpu.memory_space<vmem>>, vector<32x16xf32>
    %cst_9 = arith.constant dense<0.000000e+00> : vector<8x16xf32>
    %15 = tpu.matmul %13, %14, %cst_9 {dimension_numbers = #tpu.dot_dimension_numbers<[1], [0], [0], [1], [0, 0, 1, 1], [], []>} : vector<8x32xf32>, vector<32x16xf32>, vector<8x16xf32> -> vector<8x16xf32>
    %c0_10 = arith.constant 0 : index
    %c0_11 = arith.constant 0 : index
    %16 = vector.load %arg6[%c0_10, %c0_11] : memref<1x16xf32, #tpu.memory_space<vmem>>, vector<1x16xf32>
    %17 = vector.broadcast %16 : vector<1x16xf32> to vector<8x16xf32>
    %18 = arith.addf %15, %17 : vector<8x16xf32>
    %cst_12 = arith.constant 0.000000e+00 : f32
    %19 = vector.broadcast %cst_12 : f32 to vector<8x16xf32>
    %20 = arith.minimumf %18, %19 : vector<8x16xf32>
    %21 = math.absf %18 : vector<8x16xf32>
    %cst_13 = arith.constant 0.000000e+00 : f32
    %22 = vector.broadcast %cst_13 : f32 to vector<8x16xf32>
    %23 = arith.subf %22, %21 : vector<8x16xf32>
    %24 = math.exp %23 : vector<8x16xf32>
    %25 = math.log1p %24 : vector<8x16xf32>
    %26 = arith.subf %20, %25 : vector<8x16xf32>
    %c0_14 = arith.constant 0 : index
    %c0_15 = arith.constant 0 : index
    %27 = vector.load %arg4[%c0_14, %c0_15] : memref<16x4xf32, #tpu.memory_space<vmem>>, vector<16x4xf32>
    %cst_16 = arith.constant dense<0.000000e+00> : vector<8x4xf32>
    %28 = tpu.matmul %26, %27, %cst_16 {dimension_numbers = #tpu.dot_dimension_numbers<[1], [0], [0], [1], [0, 0, 1, 1], [], []>} : vector<8x16xf32>, vector<16x4xf32>, vector<8x4xf32> -> vector<8x4xf32>
    %c0_17 = arith.constant 0 : index
    %c0_18 = arith.constant 0 : index
    %29 = vector.load %arg7[%c0_17, %c0_18] : memref<1x4xf32, #tpu.memory_space<vmem>>, vector<1x4xf32>
    %30 = vector.broadcast %29 : vector<1x4xf32> to vector<8x4xf32>
    %31 = arith.addf %28, %30 : vector<8x4xf32>
    %c0_19 = arith.constant 0 : index
    %c0_20 = arith.constant 0 : index
    %32 = vector.load %arg8[%c0_19, %c0_20] : memref<8x4xf32, #tpu.memory_space<vmem>>, vector<8x4xf32>
    tpu.vector_store %arg8[%c0_19, %c0_20], %31 {strides = array<i32>} : memref<8x4xf32, #tpu.memory_space<vmem>>, vector<8x4xf32>,
    return
  }
  func.func @transform_0(%arg0: i32) -> (i32, i32) {
    %c0_i32 = arith.constant 0 : i32
    %c0_i32_0 = arith.constant 0 : i32
    return %arg0, %c0_i32 : i32, i32
  }
  func.func @transform_1(%arg0: i32) -> (i32, i32) {
    %c0_i32 = arith.constant 0 : i32
    %c0_i32_0 = arith.constant 0 : i32
    %c0_i32_1 = arith.constant 0 : i32
    return %c0_i32, %c0_i32_0 : i32, i32
  }
  func.func @transform_2(%arg0: i32) -> (i32, i32) {
    %c0_i32 = arith.constant 0 : i32
    %c0_i32_0 = arith.constant 0 : i32
    %c0_i32_1 = arith.constant 0 : i32
    return %c0_i32, %c0_i32_0 : i32, i32
  }
  func.func @transform_3(%arg0: i32) -> (i32, i32) {
    %c0_i32 = arith.constant 0 : i32
    %c0_i32_0 = arith.constant 0 : i32
    %c0_i32_1 = arith.constant 0 : i32
    return %c0_i32, %c0_i32_0 : i32, i32
  }
  func.func @transform_4(%arg0: i32) -> (i32, i32) {
    %c0_i32 = arith.constant 0 : i32
    %c0_i32_0 = arith.constant 0 : i32
    %c0_i32_1 = arith.constant 0 : i32
    return %c0_i32, %c0_i32_0 : i32, i32
  }
  func.func @transform_5(%arg0: i32) -> (i32, i32) {
    %c0_i32 = arith.constant 0 : i32
    %c0_i32_0 = arith.constant 0 : i32
    %c0_i32_1 = arith.constant 0 : i32
    return %c0_i32, %c0_i32_0 : i32, i32
  }
  func.func @transform_6(%arg0: i32) -> (i32, i32) {
    %c0_i32 = arith.constant 0 : i32
    %c0_i32_0 = arith.constant 0 : i32
    %c0_i32_1 = arith.constant 0 : i32
    return %c0_i32, %c0_i32_0 : i32, i32
  }
  func.func @transform_7(%arg0: i32) -> (i32, i32) {
    %c0_i32 = arith.constant 0 : i32
    %c0_i32_0 = arith.constant 0 : i32
    return %arg0, %c0_i32 : i32, i32
  }
}

</mosaic_0001>

<llo_original>
// kernel: ann_forward.1
$region0: #{ann_forward.1}
  #allocation0 [shape = 'u32[]', space=smem, size = 0x4, offset = 0x4, fixed_abs, tag = 'smem constant byte address 0x4 - core index']
  #allocation1 [shape = 'u32[144,128]{1,0:T(1,128)}', space=vmem, size = 0x12000, scoped, tag = 'internal scratch']
  %s0 = inlined_call_operand.vmem [shape: f32[8,16], index: 0, kind: input, shape index: {}]
  %s1 = inlined_call_operand.vmem [shape: f32[16,32], index: 1, kind: input, shape index: {}]
  %s2 = inlined_call_operand.vmem [shape: f32[32,16], index: 2, kind: input, shape index: {}]
  %s3 = inlined_call_operand.vmem [shape: f32[16,4], index: 3, kind: input, shape index: {}]
  %s4 = inlined_call_operand.vmem [shape: f32[1,32], index: 4, kind: input, shape index: {}]
  %s5 = inlined_call_operand.vmem [shape: f32[1,16], index: 5, kind: input, shape index: {}]
  %s6 = inlined_call_operand.vmem [shape: f32[1,4], index: 6, kind: input, shape index: {}]
  %s7 = inlined_call_operand.vmem [shape: f32[8,4], index: 7, kind: output, shape index: {}]
  %s8 = sld [smem:[#allocation0]]
  $region38: #{ann_forward.1} parent=0
    _
  %s10 = ssub.s32 1, %s8
  %s11 = scalar_select 0, %s10, %s8
  // Predicated region
  $region2: #{ann_forward.1} parent=0 // pred_check
    _
  $region3: #{ann_forward.1} parent=0 // pred_check_branch
    %13 = sbr.rel (0) target = $region5
  $region4: #{ann_forward.1} parent=0 // pred_region
    _
  $region5: #{ann_forward.1} parent=0 // pred_fallthru
    _
  // Predicated region
  $region6: #{ann_forward.1} parent=0 // pred_check
    _
  $region7: #{ann_forward.1} parent=0 // pred_check_branch
    %15 = sbr.rel (0) target = $region9
  $region8: #{ann_forward.1} parent=0 // pred_region
    _
  $region9: #{ann_forward.1} parent=0 // pred_fallthru
    _
  // Predicated region
  $region10: #{ann_forward.1} parent=0 // pred_check
    _
  $region11: #{ann_forward.1} parent=0 // pred_check_branch
    %17 = sbr.rel (0) target = $region13
  $region12: #{ann_forward.1} parent=0 // pred_region
    _
  $region13: #{ann_forward.1} parent=0 // pred_fallthru
    _
  // Predicated region
  $region14: #{ann_forward.1} parent=0 // pred_check
    _
  $region15: #{ann_forward.1} parent=0 // pred_check_branch
    %19 = sbr.rel (0) target = $region17
  $region16: #{ann_forward.1} parent=0 // pred_region
    _
  $region17: #{ann_forward.1} parent=0 // pred_fallthru
    _
  // Predicated region
  $region18: #{ann_forward.1} parent=0 // pred_check
    _
  $region19: #{ann_forward.1} parent=0 // pred_check_branch
    %21 = sbr.rel (0) target = $region21
  $region20: #{ann_forward.1} parent=0 // pred_region
    _
  $region21: #{ann_forward.1} parent=0 // pred_fallthru
    _
  // Predicated region
  $region22: #{ann_forward.1} parent=0 // pred_check
    _
  $region23: #{ann_forward.1} parent=0 // pred_check_branch
    %23 = sbr.rel (0) target = $region25
  $region24: #{ann_forward.1} parent=0 // pred_region
    _
  $region25: #{ann_forward.1} parent=0 // pred_fallthru
    _
  // Predicated region
  $region26: #{ann_forward.1} parent=0 // pred_check
    _
  $region27: #{ann_forward.1} parent=0 // pred_check_branch
    %25 = sbr.rel (0) target = $region29
  $region28: #{ann_forward.1} parent=0 // pred_region
    _
  $region29: #{ann_forward.1} parent=0 // pred_fallthru
    _
  %v26 = vld [vmem:[%s0] sm:$0xff]
  %v27 = vld [vmem:[%s1] sm:$0xff]
  %v28 = vld [vmem:[%s1 + $0x8] sm:$0xff]
  %v29 = vld [vmem:[%s4] sm:$0x1]
  %v31 = vlaneseq
  %v32 = vshrl.u32 %v31, 7
  %v33 = vsub.s32 0, %v32
  %v34 = vrot.slane %v29, %v33
  %vm36 = vcmask 130048
  %v38 = vsel %vm36, %v26, 0
  %40 = vmatprep.subr.mxu0 0.0
  %41 = vmatpush1.msra.mxu0 %v27
  %42 = vmatprep.subr.mxu0 0.0
  %43 = vmatpush1.msra.mxu0 %v28
  %44 = vmatprep.subr.mxu0 0.0
  %45 = vmatpush1.msra.mxu0 0.0
  %46 = vmatprep.subr.mxu0 0.0
  %47 = vmatpush1.msra.mxu0 0.0
  %48 = vmatprep.subr.mxu0 0.0
  %49 = vmatpush1.msra.mxu0 0.0
  %50 = vmatprep.subr.mxu0 0.0
  %51 = vmatpush1.msra.mxu0 0.0
  %52 = vmatprep.subr.mxu0 0.0
  %53 = vmatpush1.msra.mxu0 0.0
  %54 = vmatprep.subr.mxu0 0.0
  %55 = vmatpush1.msra.mxu0 0.0
  %56 = vmatprep.subr.mxu0 0.0
  %57 = vmatpush1.msra.mxu0 0.0
  %58 = vmatprep.subr.mxu0 0.0
  %59 = vmatpush1.msra.mxu0 0.0
  %60 = vmatprep.subr.mxu0 0.0
  %61 = vmatpush1.msra.mxu0 0.0
  %62 = vmatprep.subr.mxu0 0.0
  %63 = vmatpush1.msra.mxu0 0.0
  %64 = vmatprep.subr.mxu0 0.0
  %65 = vmatpush1.msra.mxu0 0.0
  %66 = vmatprep.subr.mxu0 0.0
  %67 = vmatpush1.msra.mxu0 0.0
  %68 = vmatprep.subr.mxu0 0.0
  %69 = vmatpush1.msra.mxu0 0.0
  %70 = vmatprep.subr.mxu0 0.0
  %71 = vmatpush1.msra.mxu0 0.0
  %72 = vmatprep.subr.mxu0 0.0
  %73 = vmatpush1.msra.mxu0 0.0
  %74 = vmatprep.subr.mxu0 0.0
  %75 = vmatpush1.msra.mxu0 0.0
  %76 = vmatprep.subr.mxu0 0.0
  %77 = vmatpush1.msra.mxu0 0.0
  %78 = vmatprep.subr.mxu0 0.0
  %79 = vmatpush1.msra.mxu0 0.0
  %80 = vmatprep.subr.mxu0 0.0
  %81 = vmatpush1.msra.mxu0 0.0
  %82 = vmatprep.subr.mxu0 0.0
  %83 = vmatpush1.msra.mxu0 0.0
  %84 = vmatprep.subr.mxu0 0.0
  %85 = vmatpush1.msra.mxu0 0.0
  %86 = vmatprep.subr.mxu0 0.0
  %87 = vmatpush1.msra.mxu0 0.0
  %88 = vmatprep.subr.mxu0 0.0
  %89 = vmatpush1.msra.mxu0 0.0
  %90 = vmatprep.subr.mxu0 0.0
  %91 = vmatpush1.msra.mxu0 0.0
  %92 = vmatprep.subr.mxu0 0.0
  %93 = vmatpush1.msra.mxu0 0.0
  %94 = vmatprep.subr.mxu0 0.0
  %95 = vmatpush1.msra.mxu0 0.0
  %96 = vmatprep.subr.mxu0 0.0
  %97 = vmatpush1.msra.mxu0 0.0
  %98 = vmatprep.subr.mxu0 0.0
  %99 = vmatpush1.msra.mxu0 0.0
  %100 = vmatprep.subr.mxu0 0.0
  %101 = vmatpush1.msra.mxu0 0.0
  %102 = vmatprep.subr.mxu0 0.0
  %103 = vmatpush1.msra.mxu0 0.0
  %104 = vmatprep.mubr.f32.mxu0 0.0
  %105 = vmatmul.mubr.f32.gmra.mrb[0].mxu0 %v38
  %v106 = vpop.f32.mrb[0].mxu0
  %v107 = vadd.f32 %v34, %v106
  %v108 = vpop.f32.mrb[0].mxu0
  %109 = vdwg.mxu0
  %v110 = vmin.f32 %v107, 0.0
  %v111 = vand.u32 2147483647, %v107
  %v112 = vsub.f32 0.0, %v111
  %v113 = vmul.f32 %v112, 1.442695
  %v114 = vpow.pop %v113
  %v115 = vadd.f32 %v114, 1.0
  %v116 = vlog2.pop %v115
  %v117 = vmul.f32 %v116, 0.6931472
  %v118 = vmul.f32 -0.5, %v114
  %v119 = vadd.f32 %v118, 1.0
  %v120 = vmul.f32 %v119, %v114
  %v121 = vand.u32 2147483647, %v114
  %vm122 = vcmp.lt.f32.partialorder %v121, 0.0004427343
  %v123 = vsel %vm122, %v120, %v117
  %v124 = vsub.f32 %v110, %v123
  %v125 = vld [vmem:[%s2] sm:$0xff]
  %v126 = vld [vmem:[%s2 + $0x8] sm:$0xff]
  %v127 = vld [vmem:[%s2 + $0x10] sm:$0xff]
  %v128 = vld [vmem:[%s2 + $0x18] sm:$0xff]
  %v129 = vld [vmem:[%s5] sm:$0x1]
  %v131 = vlaneseq
  %v132 = vshrl.u32 %v131, 7
  %v133 = vsub.s32 0, %v132
  %v134 = vrot.slane %v129, %v133
  %vm136 = vcmask 261120
  %v138 = vsel %vm136, %v124, 0
  %140 = vmatprep.subr.mxu0 0.0
  %141 = vmatpush1.msra.mxu0 %v125
  %142 = vmatprep.subr.mxu0 0.0
  %143 = vmatpush1.msra.mxu0 %v126
  %144 = vmatprep.subr.mxu0 0.0
  %145 = vmatpush1.msra.mxu0 %v127
  %146 = vmatprep.subr.mxu0 0.0
  %147 = vmatpush1.msra.mxu0 %v128
  %148 = vmatprep.subr.mxu0 0.0
  %149 = vmatpush1.msra.mxu0 0.0
  %150 = vmatprep.subr.mxu0 0.0
  %151 = vmatpush1.msra.mxu0 0.0
  %152 = vmatprep.subr.mxu0 0.0
  %153 = vmatpush1.msra.mxu0 0.0
  %154 = vmatprep.subr.mxu0 0.0
  %155 = vmatpush1.msra.mxu0 0.0
  %156 = vmatprep.subr.mxu0 0.0
  %157 = vmatpush1.msra.mxu0 0.0
  %158 = vmatprep.subr.mxu0 0.0
  %159 = vmatpush1.msra.mxu0 0.0
  %160 = vmatprep.subr.mxu0 0.0
  %161 = vmatpush1.msra.mxu0 0.0
  %162 = vmatprep.subr.mxu0 0.0
  %163 = vmatpush1.msra.mxu0 0.0
  %164 = vmatprep.subr.mxu0 0.0
  %165 = vmatpush1.msra.mxu0 0.0
  %166 = vmatprep.subr.mxu0 0.0
  %167 = vmatpush1.msra.mxu0 0.0
  %168 = vmatprep.subr.mxu0 0.0
  %169 = vmatpush1.msra.mxu0 0.0
  %170 = vmatprep.subr.mxu0 0.0
  %171 = vmatpush1.msra.mxu0 0.0
  %172 = vmatprep.subr.mxu0 0.0
  %173 = vmatpush1.msra.mxu0 0.0
  %174 = vmatprep.subr.mxu0 0.0
  %175 = vmatpush1.msra.mxu0 0.0
  %176 = vmatprep.subr.mxu0 0.0
  %177 = vmatpush1.msra.mxu0 0.0
  %178 = vmatprep.subr.mxu0 0.0
  %179 = vmatpush1.msra.mxu0 0.0
  %180 = vmatprep.subr.mxu0 0.0
  %181 = vmatpush1.msra.mxu0 0.0
  %182 = vmatprep.subr.mxu0 0.0
  %183 = vmatpush1.msra.mxu0 0.0
  %184 = vmatprep.subr.mxu0 0.0
  %185 = vmatpush1.msra.mxu0 0.0
  %186 = vmatprep.subr.mxu0 0.0
  %187 = vmatpush1.msra.mxu0 0.0
  %188 = vmatprep.subr.mxu0 0.0
  %189 = vmatpush1.msra.mxu0 0.0
  %190 = vmatprep.subr.mxu0 0.0
  %191 = vmatpush1.msra.mxu0 0.0
  %192 = vmatprep.subr.mxu0 0.0
  %193 = vmatpush1.msra.mxu0 0.0
  %194 = vmatprep.subr.mxu0 0.0
  %195 = vmatpush1.msra.mxu0 0.0
  %196 = vmatprep.subr.mxu0 0.0
  %197 = vmatpush1.msra.mxu0 0.0
  %198 = vmatprep.subr.mxu0 0.0
  %199 = vmatpush1.msra.mxu0 0.0
  %200 = vmatprep.subr.mxu0 0.0
  %201 = vmatpush1.msra.mxu0 0.0
  %202 = vmatprep.subr.mxu0 0.0
  %203 = vmatpush1.msra.mxu0 0.0
  %204 = vmatprep.mubr.f32.mxu0 0.0
  %205 = vmatmul.mubr.f32.gmra.mrb[0].mxu0 %v138
  %v206 = vpop.f32.mrb[0].mxu0
  %v207 = vadd.f32 %v134, %v206
  %v208 = vpop.f32.mrb[0].mxu0
  %209 = vdwg.mxu0
  %v210 = vmin.f32 %v207, 0.0
  %v211 = vand.u32 2147483647, %v207
  %v212 = vsub.f32 0.0, %v211
  %v213 = vmul.f32 %v212, 1.442695
  %v214 = vpow.pop %v213
  %v215 = vadd.f32 %v214, 1.0
  %v216 = vlog2.pop %v215
  %v217 = vmul.f32 %v216, 0.6931472
  %v218 = vmul.f32 -0.5, %v214
  %v219 = vadd.f32 %v218, 1.0
  %v220 = vmul.f32 %v219, %v214
  %v221 = vand.u32 2147483647, %v214
  %vm222 = vcmp.lt.f32.partialorder %v221, 0.0004427343
  %v223 = vsel %vm222, %v220, %v217
  %v224 = vsub.f32 %v210, %v223
  %v225 = vld [vmem:[%s3] sm:$0xff]
  %v226 = vld [vmem:[%s3 + $0x8] sm:$0xff]
  %v227 = vld [vmem:[%s6] sm:$0x1]
  %v229 = vlaneseq
  %v230 = vshrl.u32 %v229, 7
  %v231 = vsub.s32 0, %v230
  %v232 = vrot.slane %v227, %v231
  %v235 = vsel %vm36, %v224, 0
  %237 = vmatprep.subr.mxu0 0.0
  %238 = vmatpush1.msra.mxu0 %v225
  %239 = vmatprep.subr.mxu0 0.0
  %240 = vmatpush1.msra.mxu0 %v226
  %241 = vmatprep.subr.mxu0 0.0
  %242 = vmatpush1.msra.mxu0 0.0
  %243 = vmatprep.subr.mxu0 0.0
  %244 = vmatpush1.msra.mxu0 0.0
  %245 = vmatprep.subr.mxu0 0.0
  %246 = vmatpush1.msra.mxu0 0.0
  %247 = vmatprep.subr.mxu0 0.0
  %248 = vmatpush1.msra.mxu0 0.0
  %249 = vmatprep.subr.mxu0 0.0
  %250 = vmatpush1.msra.mxu0 0.0
  %251 = vmatprep.subr.mxu0 0.0
  %252 = vmatpush1.msra.mxu0 0.0
  %253 = vmatprep.subr.mxu0 0.0
  %254 = vmatpush1.msra.mxu0 0.0
  %255 = vmatprep.subr.mxu0 0.0
  %256 = vmatpush1.msra.mxu0 0.0
  %257 = vmatprep.subr.mxu0 0.0
  %258 = vmatpush1.msra.mxu0 0.0
  %259 = vmatprep.subr.mxu0 0.0
  %260 = vmatpush1.msra.mxu0 0.0
  %261 = vmatprep.subr.mxu0 0.0
  %262 = vmatpush1.msra.mxu0 0.0
  %263 = vmatprep.subr.mxu0 0.0
  %264 = vmatpush1.msra.mxu0 0.0
  %265 = vmatprep.subr.mxu0 0.0
  %266 = vmatpush1.msra.mxu0 0.0
  %267 = vmatprep.subr.mxu0 0.0
  %268 = vmatpush1.msra.mxu0 0.0
  %269 = vmatprep.subr.mxu0 0.0
  %270 = vmatpush1.msra.mxu0 0.0
  %271 = vmatprep.subr.mxu0 0.0
  %272 = vmatpush1.msra.mxu0 0.0
  %273 = vmatprep.subr.mxu0 0.0
  %274 = vmatpush1.msra.mxu0 0.0
  %275 = vmatprep.subr.mxu0 0.0
  %276 = vmatpush1.msra.mxu0 0.0
  %277 = vmatprep.subr.mxu0 0.0
  %278 = vmatpush1.msra.mxu0 0.0
  %279 = vmatprep.subr.mxu0 0.0
  %280 = vmatpush1.msra.mxu0 0.0
  %281 = vmatprep.subr.mxu0 0.0
  %282 = vmatpush1.msra.mxu0 0.0
  %283 = vmatprep.subr.mxu0 0.0
  %284 = vmatpush1.msra.mxu0 0.0
  %285 = vmatprep.subr.mxu0 0.0
  %286 = vmatpush1.msra.mxu0 0.0
  %287 = vmatprep.subr.mxu0 0.0
  %288 = vmatpush1.msra.mxu0 0.0
  %289 = vmatprep.subr.mxu0 0.0
  %290 = vmatpush1.msra.mxu0 0.0
  %291 = vmatprep.subr.mxu0 0.0
  %292 = vmatpush1.msra.mxu0 0.0
  %293 = vmatprep.subr.mxu0 0.0
  %294 = vmatpush1.msra.mxu0 0.0
  %295 = vmatprep.subr.mxu0 0.0
  %296 = vmatpush1.msra.mxu0 0.0
  %297 = vmatprep.subr.mxu0 0.0
  %298 = vmatpush1.msra.mxu0 0.0
  %299 = vmatprep.subr.mxu0 0.0
  %300 = vmatpush1.msra.mxu0 0.0
  %301 = vmatprep.mubr.f32.mxu0 0.0
  %302 = vmatmul.mubr.f32.gmra.mrb[0].mxu0 %v235
  %v303 = vpop.f32.mrb[0].mxu0
  %v304 = vadd.f32 %v232, %v303
  %v305 = vpop.f32.mrb[0].mxu0
  %306 = vdwg.mxu0
  %vm307 = vcmask 31744
  %308 = vst.msk [vmem:[%s7] sm:$0xff] %vm307, %v304
  // Predicated region
  $region30: #{ann_forward.1} parent=0 // pred_check
    _
  $region31: #{ann_forward.1} parent=0 // pred_check_branch
    %310 = sbr.rel (0) target = $region33
  $region32: #{ann_forward.1} parent=0 // pred_region
    _
  $region33: #{ann_forward.1} parent=0 // pred_fallthru
    _
  // Predicated region
  $region34: #{ann_forward.1} parent=0 // pred_check
    _
  $region35: #{ann_forward.1} parent=0 // pred_check_branch
    %312 = sbr.rel (0) target = $region37
  $region36: #{ann_forward.1} parent=0 // pred_region
    _
  $region37: #{ann_forward.1} parent=0 // pred_fallthru
    _

</llo_original>
